<compile_context>
chip_gen: v5e
topology: v5e:2x2
jax: 0.10.0
libtpu: 0.0.40
codegen_flags: <defaults>
</compile_context>

<pallas_src>
import functools

import numpy as np
import jax
import jax.numpy as jnp
from jax.experimental import pallas as pl
from jax.experimental.pallas import tpu as pltpu


# ---------------------------------------------------------------------------
# Slab layout: per grid step, BB images are stacked row-wise in a padded slab.
#   image b, row y  ->  slab row  L + b*P + y
# L (leading halo) and P (per-image stride) are multiples of 8 so every data /
# output slice is sublane-aligned; the rows in between are the 3x3 conv's zero
# halo rows (shared between neighbouring images).
# ---------------------------------------------------------------------------
def _round_up(x, m):
    return ((x + m - 1) // m) * m


def _slab_layout(Hs, BB):
    L = 8                                   # leading zero rows (top halo of image 0)
    P = _round_up(Hs + 1, 8)                # per-image row stride (>= Hs + 1 halo row)
    M = (BB - 1) * P + Hs                   # rows per banded matmul
    rows = _round_up(L + M + 1, 8)          # slab rows (incl. bottom halo of last image)
    return L, P, M, rows


def _halo_ranges(Hs, BB):
    """Row ranges of the slab that must be zero (conv halos / alignment pad)."""
    L, P, _, rows = _slab_layout(Hs, BB)
    r = [(0, L)]
    for b in range(BB - 1):
        r.append((L + b * P + Hs, L + (b + 1) * P))
    r.append((L + (BB - 1) * P + Hs, rows))
    return r


# ---------------------------------------------------------------------------
# Fused kernel: upsample + pad + concat + conv1 + BN + ReLU + conv2 + BN + ReLU
# for one batch block.  Row-packed layout: element (y, x*C + c).
# ---------------------------------------------------------------------------
def _up_fused_kernel(x1_ref, x2_ref, uxc_ref, ubig_ref, m1_ref, b1_ref,
                     m2_ref, b2_ref, o_ref, cat_ref, hp_ref, *, BB, Hs):
    # x1_ref : (BB*H1, W1*C1)        bf16  low-res input, row-packed
    # x2_ref : (BB*Hs, Ws*C2)        bf16  skip connection, row-packed
    # uxc_ref: (W1*C1, Ws*(C2+C1))   bf16  width interp + F.pad cols, written into
    #                                      the slab's `up` column block (x2 cols zero)
    # ubig_ref:(rows, BB*H1)         bf16  height interp + F.pad rows + halo rows (zero)
    # m1_ref : (3, Ws*(C2+C1), Ws*Cm) bf16 banded conv1 weights (concat fused, BN folded)
    # b1_ref : (1, Ws*Cm)            f32
    # m2_ref : (3, Ws*Cm, Ws*Co)     bf16  banded conv2 weights (BN folded)
    # b2_ref : (1, Ws*Co)            f32
    # o_ref  : (BB*Hs, Ws*Co)        f32   lane-dense output
    # cat_ref: (rows, Ws*(C2+C1))    bf16  scratch: [x2 | upsampled x1] padded slab
    # hp_ref : (rows, Ws*Cm)         bf16  scratch: padded intermediate activation
    L, P, M, _ = _slab_layout(Hs, BB)
    W2C = x2_ref.shape[1]

    # (1) Bilinear x2 upsample (align_corners=True) + F.pad, width interp first,
    #     as two bf16 MXU matmuls with f32 accumulation.  ubig's zero rows cover
    #     the halo / pad / separator rows and uxc's zero columns cover the x2
    #     half, so this single full-width store fully initializes the slab.
    tmp = jnp.dot(x1_ref[...], uxc_ref[...], preferred_element_type=jnp.float32)
    up = jnp.dot(ubig_ref[...], tmp.astype(jnp.bfloat16),
                 preferred_element_type=jnp.float32)
    cat_ref[...] = up.astype(jnp.bfloat16)             # single bf16 cast of `up`

    # (2) Fused concat: copy the skip connection into the left column block
    #     (already bf16, 8-aligned row offsets).
    for b in range(BB):
        r0 = L + b * P
        cat_ref[r0:r0 + Hs, :W2C] = x2_ref[b * Hs:(b + 1) * Hs, :]

    # (3) Conv1 (3x3, bias-free) + folded BN + ReLU: 3 banded bf16 matmuls with
    #     K = Ws*(C2+C1) (concat halves fused into one K), f32 accumulation.
    acc1 = jnp.zeros((M, b1_ref.shape[1]), jnp.float32)
    for dy in range(3):
        acc1 += jnp.dot(cat_ref[L - 1 + dy:L - 1 + dy + M, :], m1_ref[dy],
                        preferred_element_type=jnp.float32)
    h = jnp.maximum(acc1 + b1_ref[...], 0.0).astype(jnp.bfloat16)   # single cast

    # (4) Intermediate activation stays resident in VMEM (bf16): one big store,
    #     then only the halo rows are zeroed (no full-buffer memset).
    hp_ref[L:L + M, :] = h
    for lo, hi in _halo_ranges(Hs, BB):
        hp_ref[lo:hi, :] = jnp.zeros((hi - lo, hp_ref.shape[1]), jnp.bfloat16)

    # (5) Conv2 (3x3) + folded BN + ReLU: 3 banded bf16 matmuls.
    acc2 = jnp.zeros((M, b2_ref.shape[1]), jnp.float32)
    for dy in range(3):
        acc2 += jnp.dot(hp_ref[L - 1 + dy:L - 1 + dy + M, :], m2_ref[dy],
                        preferred_element_type=jnp.float32)
    out = jnp.maximum(acc2 + b2_ref[...], 0.0)

    # (6) Lane-dense, sublane-aligned per-image stores (b*P, b*Hs multiples of 8).
    for b in range(BB):
        o_ref[b * Hs:(b + 1) * Hs, :] = out[b * P:b * P + Hs].astype(o_ref.dtype)
    # nn.Dropout is identity in eval mode.


# ---------------------------------------------------------------------------
# Host-side (numpy) constant construction: done once, closed over by the jit.
# ---------------------------------------------------------------------------
def _interp_matrix_np(n_in, n_out):
    """(n_out, n_in) 1-D linear interpolation weights, align_corners=True."""
    m = np.zeros((n_out, n_in), np.float32)
    if n_out == 1:
        m[0, 0] = 1.0
        return m
    scale = (n_in - 1) / (n_out - 1)
    for o in range(n_out):
        s = o * scale
        i0 = min(int(np.floor(s)), n_in - 1)
        i1 = min(i0 + 1, n_in - 1)
        w = s - i0
        m[o, i0] += 1.0 - w
        m[o, i1] += w
    return m


def _banded_conv_weights_np(w_hwio, scale, width):
    """BN-scale-folded 3x3 conv laid out as 3 banded matmul weights.

    Returns M of shape (3, width*Cin, width*Cout) with
      M[dy, xi*Cin + ci, xo*Cout + co] = w[dy, xi - xo + 1, ci, co] * scale[co]
    (zero outside the band), so in row-packed (y, x*C + c) layout
      out[y] = sum_dy padded_in[y - 1 + dy] @ M[dy]
    is the full "same" 3x3 convolution (column zero padding = the band edge).
    """
    _, _, cin, cout = w_hwio.shape
    ws = (w_hwio * scale[None, None, None, :]).astype(np.float32)
    m = np.zeros((3, width, cin, width, cout), np.float32)
    for dy in range(3):
        for kx in range(3):
            for xo in range(width):
                xi = xo + kx - 1
                if 0 <= xi < width:
                    m[dy, xi, :, xo, :] = ws[dy, kx]
    return m.reshape(3, width * cin, width * cout)


def make_up_forward(params, x1_shape, x2_shape, batch_block=None):
    """Build the fused `Up` forward (NCHW in / NCHW out, eval-mode BN & Dropout)."""
    B, C1, H1, W1 = map(int, x1_shape)
    B2, C2, Hs, Ws = map(int, x2_shape)
    assert B == B2
    BB = B if batch_block is None else int(batch_block)
    assert B % BB == 0, "batch_block must divide the batch size"
    Ho, Wo = 2 * H1, 2 * W1
    assert Ho <= Hs and Wo <= Ws
    L, P, _, rows = _slab_layout(Hs, BB)

    w1 = np.asarray(params["w1"], np.float32)           # (3,3,C2+C1,Cm) HWIO
    w2 = np.asarray(params["w2"], np.float32)           # (3,3,Cm,Co)
    s1 = np.asarray(params["scale1"], np.float32)
    b1 = np.asarray(params["bias1"], np.float32)
    s2 = np.asarray(params["scale2"], np.float32)
    b2 = np.asarray(params["bias2"], np.float32)
    Cm, Co = int(w1.shape[-1]), int(w2.shape[-1])
    W1C, W2C = W1 * C1, Ws * C2
    CATW, WCm, WCo = Ws * (C2 + C1), Ws * Cm, Ws * Co

    # Banded, BN-folded conv weights; conv1's two concat halves stacked along K
    # to match the slab's [x2 | up] column order (torch.cat([x2, x1], dim=1)).
    m1 = np.concatenate([_banded_conv_weights_np(w1[:, :, :C2, :], s1, Ws),
                         _banded_conv_weights_np(w1[:, :, C2:, :], s1, Ws)], axis=1)
    m2 = _banded_conv_weights_np(w2, s2, Ws)
    b1p = np.tile(b1, Ws).reshape(1, WCm)
    b2p = np.tile(b2, Ws).reshape(1, WCo)

    # Width interpolation (+ F.pad left/right) written directly into the `up`
    # column block of the slab; the x2 column block stays zero.
    pad_l, pad_t = (Ws - Wo) // 2, (Hs - Ho) // 2
    uxc = np.zeros((W1C, CATW), np.float32)
    uxc[:, W2C + pad_l * C1:W2C + (pad_l + Wo) * C1] = np.kron(
        _interp_matrix_np(W1, Wo).T, np.eye(C1, dtype=np.float32))

    # Height interpolation (+ F.pad top/bottom) + conv halo rows + batch stacking.
    hy = _interp_matrix_np(H1, Ho)
    ubig = np.zeros((rows, BB * H1), np.float32)
    for b in range(BB):
        r0 = L + b * P + pad_t
        ubig[r0:r0 + Ho, b * H1:(b + 1) * H1] = hy

    uxc_d = jnp.asarray(uxc, jnp.bfloat16)
    ubig_d = jnp.asarray(ubig, jnp.bfloat16)
    m1_d = jnp.asarray(m1, jnp.bfloat16)
    m2_d = jnp.asarray(m2, jnp.bfloat16)
    b1_d = jnp.asarray(b1p, jnp.float32)
    b2_d = jnp.asarray(b2p, jnp.float32)

    kernel = functools.partial(_up_fused_kernel, BB=BB, Hs=Hs)
    call = pl.pallas_call(
        kernel,
        out_shape=jax.ShapeDtypeStruct((B * Hs, WCo), jnp.float32),
        grid=(B // BB,),
        in_specs=[
            pl.BlockSpec((BB * H1, W1C), lambda i: (i, 0)),
            pl.BlockSpec((BB * Hs, W2C), lambda i: (i, 0)),
            # Constant index maps -> these blocks stay resident across the grid.
            pl.BlockSpec((W1C, CATW), lambda i: (0, 0)),
            pl.BlockSpec((rows, BB * H1), lambda i: (0, 0)),
            pl.BlockSpec((3, CATW, WCm), lambda i: (0, 0, 0)),
            pl.BlockSpec((1, WCm), lambda i: (0, 0)),
            pl.BlockSpec((3, WCm, WCo), lambda i: (0, 0, 0)),
            pl.BlockSpec((1, WCo), lambda i: (0, 0)),
        ],
        out_specs=pl.BlockSpec((BB * Hs, WCo), lambda i: (i, 0)),
        scratch_shapes=[
            pltpu.VMEM((rows, CATW), jnp.bfloat16),    # [x2 | up] padded slab (bf16)
            pltpu.VMEM((rows, WCm), jnp.bfloat16),     # padded intermediate h (bf16)
        ],
        # TODO(synk): at production U-Net sizes, tile along H with a 2-row halo,
        # switch to channel-packed (rows, Cin) matmuls, and set vmem_limit_bytes
        # for v7x's 64 MiB VMEM; the banded layout only wins at tiny Cin.
        compiler_params=pltpu.CompilerParams(dimension_semantics=("parallel",)),
    )

    @jax.jit
    def forward(x1_nchw, x2_nchw):
        # NCHW -> row-packed (rows, W*C), bf16 to halve the HBM reads.
        x1p = jnp.transpose(x1_nchw, (0, 2, 3, 1)).reshape(B * H1, W1C).astype(jnp.bfloat16)
        x2p = jnp.transpose(x2_nchw, (0, 2, 3, 1)).reshape(B * Hs, W2C).astype(jnp.bfloat16)
        out = call(x1p, x2p, uxc_d, ubig_d, m1_d, b1_d, m2_d, b2_d)
        return jnp.transpose(out.reshape(B, Hs, Ws, Co), (0, 3, 1, 2))   # -> NCHW

    return forward


# ---------------------------------------------------------------------------
# Pure-JAX reference (PyTorch semantics, conv inputs/weights at bf16 precision).
# Note: the kernel also does the bilinear interpolation in bf16 (MXU path);
# the difference stays well inside the 5e-2 tolerance.
# ---------------------------------------------------------------------------
def _bilinear_up_x2_align_corners(x):  # NHWC, f32
    B, H, W, C = x.shape
    Ho, Wo = 2 * H, 2 * W
    ys = jnp.arange(Ho, dtype=jnp.float32) * (float(H - 1) / float(Ho - 1))
    xs = jnp.arange(Wo, dtype=jnp.float32) * (float(W - 1) / float(Wo - 1))
    y0 = jnp.floor(ys).astype(jnp.int32)
    x0 = jnp.floor(xs).astype(jnp.int32)
    y1 = jnp.minimum(y0 + 1, H - 1)
    x1 = jnp.minimum(x0 + 1, W - 1)
    wy = (ys - y0.astype(jnp.float32))[None, :, None, None]
    wx = (xs - x0.astype(jnp.float32))[None, None, :, None]

    def g(yi, xi):
        return x[:, yi][:, :, xi]

    top = g(y0, x0) * (1.0 - wx) + g(y0, x1) * wx
    bot = g(y1, x0) * (1.0 - wx) + g(y1, x1) * wx
    return top * (1.0 - wy) + bot * wy


def ref_forward(x1_nchw, x2_nchw, params):
    def bf(a):
        return a.astype(jnp.bfloat16).astype(jnp.float32)

    x1 = jnp.transpose(x1_nchw, (0, 2, 3, 1)).astype(jnp.float32)
    x2 = jnp.transpose(x2_nchw, (0, 2, 3, 1)).astype(jnp.float32)
    x1 = _bilinear_up_x2_align_corners(x1)
    dy = x2.shape[1] - x1.shape[1]
    dx = x2.shape[2] - x1.shape[2]
    if dy != 0 or dx != 0:
        x1 = jnp.pad(x1, ((0, 0), (dy // 2, dy - dy // 2),
                          (dx // 2, dx - dx // 2), (0, 0)))
    x = jnp.concatenate([x2, x1], axis=-1)

    def conv_bn_relu(v, w, scale, bias):
        y = jax.lax.conv_general_dilated(
            bf(v), bf(w * scale[None, None, None, :]), (1, 1), "SAME",
            dimension_numbers=("NHWC", "HWIO", "NHWC"),
            preferred_element_type=jnp.float32)
        return jnp.maximum(y + bias[None, None, None, :], 0.0)

    h = conv_bn_relu(x, params["w1"], params["scale1"], params["bias1"])
    y = conv_bn_relu(h, params["w2"], params["scale2"], params["bias2"])
    return jnp.transpose(y, (0, 3, 1, 2))


# ---------------------------------------------------------------------------
def make_params(key, in_channels, out_channels):
    """DoubleConv(in_channels, out_channels, mid=in_channels//2), BN folded."""
    mid = in_channels // 2
    eps = 1e-5
    ks = jax.random.split(key, 10)

    def bn_fold(kg, kb, km, kv, c):
        gamma = 1.0 + 0.1 * jax.random.normal(kg, (c,), jnp.float32)
        beta = 0.1 * jax.random.normal(kb, (c,), jnp.float32)
        rmean = 0.1 * jax.random.normal(km, (c,), jnp.float32)
        rvar = jnp.abs(jax.random.normal(kv, (c,), jnp.float32)) + 0.5
        scale = gamma / jnp.sqrt(rvar + eps)
        bias = beta - rmean * scale
        return scale, bias

    w1 = 0.2 * jax.random.normal(ks[0], (3, 3, in_channels, mid), jnp.float32)
    w2 = 0.2 * jax.random.normal(ks[1], (3, 3, mid, out_channels), jnp.float32)
    scale1, bias1 = bn_fold(ks[2], ks[3], ks[4], ks[5], mid)
    scale2, bias2 = bn_fold(ks[6], ks[7], ks[8], ks[9], out_channels)
    return dict(w1=w1, scale1=scale1, bias1=bias1,
                w2=w2, scale2=scale2, bias2=bias2)


if __name__ == "__main__":
    key = jax.random.PRNGKey(0)
    k1, k2, kp = jax.random.split(key, 3)

    # Up(in_channels=8, out_channels=8, bilinear=True):
    #   x1 (low-res) and x2 (skip) each carry in_channels//2 channels.
    in_channels, out_channels = 8, 8
    B, H1, W1 = 2, 8, 8
    x1 = jax.random.normal(k1, (B, in_channels // 2, H1, W1), jnp.float32)
    x2 = jax.random.normal(k2, (B, in_channels // 2, 2 * H1, 2 * W1), jnp.float32)
    params = make_params(kp, in_channels, out_channels)

    fwd = make_up_forward(params, x1.shape, x2.shape)
    out = jax.block_until_ready(fwd(x1, x2))

    ref = ref_forward(x1, x2, params)
    assert out.shape == (B, out_channels, 2 * H1, 2 * W1), out.shape
    max_err = float(jnp.max(jnp.abs(out - ref)))
    assert jnp.allclose(out, ref, atol=5e-2, rtol=5e-2), f"max_err={max_err}"
    print("KERNEL_OK")
</pallas_src>

<mosaic_0001>
module attributes {stable_mosaic.version = 11 : i64} {
  func.func @_up_fused_kernel(%arg0: i32, %arg1: memref<16x32xbf16, #tpu.memory_space<vmem>>, %arg2: memref<32x64xbf16, #tpu.memory_space<vmem>>, %arg3: memref<32x128xbf16, #tpu.memory_space<vmem>>, %arg4: memref<56x16xbf16, #tpu.memory_space<vmem>>, %arg5: memref<3x128x64xbf16, #tpu.memory_space<vmem>>, %arg6: memref<1x64xf32, #tpu.memory_space<vmem>>, %arg7: memref<3x64x128xbf16, #tpu.memory_space<vmem>>, %arg8: memref<1x128xf32, #tpu.memory_space<vmem>>, %arg9: memref<32x128xf32, #tpu.memory_space<vmem>>, %arg10: memref<56x128xbf16, #tpu.memory_space<vmem>>, %arg11: memref<56x64xbf16, #tpu.memory_space<vmem>>) attributes {dimension_semantics = [#tpu.dimension_semantics<parallel>], iteration_bounds = array<i64: 1>, scalar_prefetch = 0 : i64, scratch_operands = 2 : i64, tpu.core_type = #tpu.core_type<tc>, window_params = [{transform_indices = @transform_0, window_bounds = array<i64: 16, 32>}, {transform_indices = @transform_1, window_bounds = array<i64: 32, 64>}, {pipeline_mode = #tpu.pipeline_mode<synchronous>, transform_indices = @transform_2, window_bounds = array<i64: 32, 128>}, {pipeline_mode = #tpu.pipeline_mode<synchronous>, transform_indices = @transform_3, window_bounds = array<i64: 56, 16>}, {pipeline_mode = #tpu.pipeline_mode<synchronous>, transform_indices = @transform_4, window_bounds = array<i64: 3, 128, 64>}, {pipeline_mode = #tpu.pipeline_mode<synchronous>, transform_indices = @transform_5, window_bounds = array<i64: 1, 64>}, {pipeline_mode = #tpu.pipeline_mode<synchronous>, transform_indices = @transform_6, window_bounds = array<i64: 3, 64, 128>}, {pipeline_mode = #tpu.pipeline_mode<synchronous>, transform_indices = @transform_7, window_bounds = array<i64: 1, 128>}, {transform_indices = @transform_8, window_bounds = array<i64: 32, 128>}]} {
    %c0 = arith.constant 0 : index
    %c0_0 = arith.constant 0 : index
    %0 = vector.load %arg1[%c0, %c0_0] : memref<16x32xbf16, #tpu.memory_space<vmem>>, vector<16x32xbf16>
    %c0_1 = arith.constant 0 : index
    %c0_2 = arith.constant 0 : index
    %1 = vector.load %arg3[%c0_1, %c0_2] : memref<32x128xbf16, #tpu.memory_space<vmem>>, vector<32x128xbf16>
    %cst = arith.constant dense<0.000000e+00> : vector<16x128xf32>
    %2 = tpu.matmul %0, %1, %cst {dimension_numbers = #tpu.dot_dimension_numbers<[1], [0], [0], [1], [0, 0, 1, 1], [], []>} : vector<16x32xbf16>, vector<32x128xbf16>, vector<16x128xf32> -> vector<16x128xf32>
    %c0_3 = arith.constant 0 : index
    %c0_4 = arith.constant 0 : index
    %3 = vector.load %arg4[%c0_3, %c0_4] : memref<56x16xbf16, #tpu.memory_space<vmem>>, vector<56x16xbf16>
    %4 = arith.truncf %2 : vector<16x128xf32> to vector<16x128xbf16>
    %cst_5 = arith.constant dense<0.000000e+00> : vector<56x128xf32>
    %5 = tpu.matmul %3, %4, %cst_5 {dimension_numbers = #tpu.dot_dimension_numbers<[1], [0], [0], [1], [0, 0, 1, 1], [], []>} : vector<56x16xbf16>, vector<16x128xbf16>, vector<56x128xf32> -> vector<56x128xf32>
    %6 = arith.truncf %5 : vector<56x128xf32> to vector<56x128xbf16>
    %c0_6 = arith.constant 0 : index
    %c0_7 = arith.constant 0 : index
    %7 = vector.load %arg10[%c0_6, %c0_7] : memref<56x128xbf16, #tpu.memory_space<vmem>>, vector<56x128xbf16>
    tpu.vector_store %arg10[%c0_6, %c0_7], %6 {strides = array<i32>} : memref<56x128xbf16, #tpu.memory_space<vmem>>, vector<56x128xbf16>,
    %c0_8 = arith.constant 0 : index
    %c0_9 = arith.constant 0 : index
    %8 = vector.load %arg2[%c0_8, %c0_9] : memref<32x64xbf16, #tpu.memory_space<vmem>>, vector<16x64xbf16>
    %c8 = arith.constant 8 : index
    %c0_10 = arith.constant 0 : index
    %9 = vector.load %arg10[%c8, %c0_10] : memref<56x128xbf16, #tpu.memory_space<vmem>>, vector<16x64xbf16>
    tpu.vector_store %arg10[%c8, %c0_10], %8 {strides = array<i32>} : memref<56x128xbf16, #tpu.memory_space<vmem>>, vector<16x64xbf16>,
    %c16 = arith.constant 16 : index
    %c0_11 = arith.constant 0 : index
    %10 = vector.load %arg2[%c16, %c0_11] : memref<32x64xbf16, #tpu.memory_space<vmem>>, vector<16x64xbf16>
    %c32 = arith.constant 32 : index
    %c0_12 = arith.constant 0 : index
    %11 = vector.load %arg10[%c32, %c0_12] : memref<56x128xbf16, #tpu.memory_space<vmem>>, vector<16x64xbf16>
    tpu.vector_store %arg10[%c32, %c0_12], %10 {strides = array<i32>} : memref<56x128xbf16, #tpu.memory_space<vmem>>, vector<16x64xbf16>,
    %cst_13 = arith.constant 0.000000e+00 : f32
    %12 = vector.broadcast %cst_13 : f32 to vector<40x64xf32>
    %c7 = arith.constant 7 : index
    %c0_14 = arith.constant 0 : index
    %13 = vector.load %arg10[%c7, %c0_14] : memref<56x128xbf16, #tpu.memory_space<vmem>>, vector<40x128xbf16>
    %c0_15 = arith.constant 0 : index
    %c0_16 = arith.constant 0 : index
    %c0_17 = arith.constant 0 : index
    %14 = vector.load %arg5[%c0_15, %c0_16, %c0_17] : memref<3x128x64xbf16, #tpu.memory_space<vmem>>, vector<1x128x64xbf16>
    %15 = vector.shape_cast %14 : vector<1x128x64xbf16> to vector<128x64xbf16>
    %cst_18 = arith.constant dense<0.000000e+00> : vector<40x64xf32>
    %16 = tpu.matmul %13, %15, %cst_18 {dimension_numbers = #tpu.dot_dimension_numbers<[1], [0], [0], [1], [0, 0, 1, 1], [], []>} : vector<40x128xbf16>, vector<128x64xbf16>, vector<40x64xf32> -> vector<40x64xf32>
    %17 = arith.addf %12, %16 : vector<40x64xf32>
    %c8_19 = arith.constant 8 : index
    %c0_20 = arith.constant 0 : index
    %18 = vector.load %arg10[%c8_19, %c0_20] : memref<56x128xbf16, #tpu.memory_space<vmem>>, vector<40x128xbf16>
    %c1 = arith.constant 1 : index
    %c0_21 = arith.constant 0 : index
    %c0_22 = arith.constant 0 : index
    %19 = vector.load %arg5[%c1, %c0_21, %c0_22] : memref<3x128x64xbf16, #tpu.memory_space<vmem>>, vector<1x128x64xbf16>
    %20 = vector.shape_cast %19 : vector<1x128x64xbf16> to vector<128x64xbf16>
    %cst_23 = arith.constant dense<0.000000e+00> : vector<40x64xf32>
    %21 = tpu.matmul %18, %20, %cst_23 {dimension_numbers = #tpu.dot_dimension_numbers<[1], [0], [0], [1], [0, 0, 1, 1], [], []>} : vector<40x128xbf16>, vector<128x64xbf16>, vector<40x64xf32> -> vector<40x64xf32>
    %22 = arith.addf %17, %21 : vector<40x64xf32>
    %c9 = arith.constant 9 : index
    %c0_24 = arith.constant 0 : index
    %23 = vector.load %arg10[%c9, %c0_24] : memref<56x128xbf16, #tpu.memory_space<vmem>>, vector<40x128xbf16>
    %c2 = arith.constant 2 : index
    %c0_25 = arith.constant 0 : index
    %c0_26 = arith.constant 0 : index
    %24 = vector.load %arg5[%c2, %c0_25, %c0_26] : memref<3x128x64xbf16, #tpu.memory_space<vmem>>, vector<1x128x64xbf16>
    %25 = vector.shape_cast %24 : vector<1x128x64xbf16> to vector<128x64xbf16>
    %cst_27 = arith.constant dense<0.000000e+00> : vector<40x64xf32>
    %26 = tpu.matmul %23, %25, %cst_27 {dimension_numbers = #tpu.dot_dimension_numbers<[1], [0], [0], [1], [0, 0, 1, 1], [], []>} : vector<40x128xbf16>, vector<128x64xbf16>, vector<40x64xf32> -> vector<40x64xf32>
    %27 = arith.addf %22, %26 : vector<40x64xf32>
    %c0_28 = arith.constant 0 : index
    %c0_29 = arith.constant 0 : index
    %28 = vector.load %arg6[%c0_28, %c0_29] : memref<1x64xf32, #tpu.memory_space<vmem>>, vector<1x64xf32>
    %29 = vector.broadcast %28 : vector<1x64xf32> to vector<40x64xf32>
    %30 = arith.addf %27, %29 : vector<40x64xf32>
    %cst_30 = arith.constant 0.000000e+00 : f32
    %31 = vector.broadcast %cst_30 : f32 to vector<40x64xf32>
    %32 = arith.maximumf %30, %31 : vector<40x64xf32>
    %33 = arith.truncf %32 : vector<40x64xf32> to vector<40x64xbf16>
    %c8_31 = arith.constant 8 : index
    %c0_32 = arith.constant 0 : index
    %34 = vector.load %arg11[%c8_31, %c0_32] : memref<56x64xbf16, #tpu.memory_space<vmem>>, vector<40x64xbf16>
    tpu.vector_store %arg11[%c8_31, %c0_32], %33 {strides = array<i32>} : memref<56x64xbf16, #tpu.memory_space<vmem>>, vector<40x64xbf16>,
    %cst_33 = arith.constant 0.000000e+00 : bf16
    %35 = vector.broadcast %cst_33 : bf16 to vector<8x64xbf16>
    %c0_34 = arith.constant 0 : index
    %c0_35 = arith.constant 0 : index
    %36 = vector.load %arg11[%c0_34, %c0_35] : memref<56x64xbf16, #tpu.memory_space<vmem>>, vector<8x64xbf16>
    tpu.vector_store %arg11[%c0_34, %c0_35], %35 {strides = array<i32>} : memref<56x64xbf16, #tpu.memory_space<vmem>>, vector<8x64xbf16>,
    %cst_36 = arith.constant 0.000000e+00 : bf16
    %37 = vector.broadcast %cst_36 : bf16 to vector<8x64xbf16>
    %c24 = arith.constant 24 : index
    %c0_37 = arith.constant 0 : index
    %38 = vector.load %arg11[%c24, %c0_37] : memref<56x64xbf16, #tpu.memory_space<vmem>>, vector<8x64xbf16>
    tpu.vector_store %arg11[%c24, %c0_37], %37 {strides = array<i32>} : memref<56x64xbf16, #tpu.memory_space<vmem>>, vector<8x64xbf16>,
    %cst_38 = arith.constant 0.000000e+00 : bf16
    %39 = vector.broadcast %cst_38 : bf16 to vector<8x64xbf16>
    %c48 = arith.constant 48 : index
    %c0_39 = arith.constant 0 : index
    %40 = vector.load %arg11[%c48, %c0_39] : memref<56x64xbf16, #tpu.memory_space<vmem>>, vector<8x64xbf16>
    tpu.vector_store %arg11[%c48, %c0_39], %39 {strides = array<i32>} : memref<56x64xbf16, #tpu.memory_space<vmem>>, vector<8x64xbf16>,
    %cst_40 = arith.constant 0.000000e+00 : f32
    %41 = vector.broadcast %cst_40 : f32 to vector<40x128xf32>
    %c7_41 = arith.constant 7 : index
    %c0_42 = arith.constant 0 : index
    %42 = vector.load %arg11[%c7_41, %c0_42] : memref<56x64xbf16, #tpu.memory_space<vmem>>, vector<40x64xbf16>
    %c0_43 = arith.constant 0 : index
    %c0_44 = arith.constant 0 : index
    %c0_45 = arith.constant 0 : index
    %43 = vector.load %arg7[%c0_43, %c0_44, %c0_45] : memref<3x64x128xbf16, #tpu.memory_space<vmem>>, vector<1x64x128xbf16>
    %44 = vector.shape_cast %43 : vector<1x64x128xbf16> to vector<64x128xbf16>
    %cst_46 = arith.constant dense<0.000000e+00> : vector<40x128xf32>
    %45 = tpu.matmul %42, %44, %cst_46 {dimension_numbers = #tpu.dot_dimension_numbers<[1], [0], [0], [1], [0, 0, 1, 1], [], []>} : vector<40x64xbf16>, vector<64x128xbf16>, vector<40x128xf32> -> vector<40x128xf32>
    %46 = arith.addf %41, %45 : vector<40x128xf32>
    %c8_47 = arith.constant 8 : index
    %c0_48 = arith.constant 0 : index
    %47 = vector.load %arg11[%c8_47, %c0_48] : memref<56x64xbf16, #tpu.memory_space<vmem>>, vector<40x64xbf16>
    %c1_49 = arith.constant 1 : index
    %c0_50 = arith.constant 0 : index
    %c0_51 = arith.constant 0 : index
    %48 = vector.load %arg7[%c1_49, %c0_50, %c0_51] : memref<3x64x128xbf16, #tpu.memory_space<vmem>>, vector<1x64x128xbf16>
    %49 = vector.shape_cast %48 : vector<1x64x128xbf16> to vector<64x128xbf16>
    %cst_52 = arith.constant dense<0.000000e+00> : vector<40x128xf32>
    %50 = tpu.matmul %47, %49, %cst_52 {dimension_numbers = #tpu.dot_dimension_numbers<[1], [0], [0], [1], [0, 0, 1, 1], [], []>} : vector<40x64xbf16>, vector<64x128xbf16>, vector<40x128xf32> -> vector<40x128xf32>
    %51 = arith.addf %46, %50 : vector<40x128xf32>
    %c9_53 = arith.constant 9 : index
    %c0_54 = arith.constant 0 : index
    %52 = vector.load %arg11[%c9_53, %c0_54] : memref<56x64xbf16, #tpu.memory_space<vmem>>, vector<40x64xbf16>
    %c2_55 = arith.constant 2 : index
    %c0_56 = arith.constant 0 : index
    %c0_57 = arith.constant 0 : index
    %53 = vector.load %arg7[%c2_55, %c0_56, %c0_57] : memref<3x64x128xbf16, #tpu.memory_space<vmem>>, vector<1x64x128xbf16>
    %54 = vector.shape_cast %53 : vector<1x64x128xbf16> to vector<64x128xbf16>
    %cst_58 = arith.constant dense<0.000000e+00> : vector<40x128xf32>
    %55 = tpu.matmul %52, %54, %cst_58 {dimension_numbers = #tpu.dot_dimension_numbers<[1], [0], [0], [1], [0, 0, 1, 1], [], []>} : vector<40x64xbf16>, vector<64x128xbf16>, vector<40x128xf32> -> vector<40x128xf32>
    %56 = arith.addf %51, %55 : vector<40x128xf32>
    %c0_59 = arith.constant 0 : index
    %c0_60 = arith.constant 0 : index
    %57 = vector.load %arg8[%c0_59, %c0_60] : memref<1x128xf32, #tpu.memory_space<vmem>>, vector<1x128xf32>
    %58 = vector.broadcast %57 : vector<1x128xf32> to vector<40x128xf32>
    %59 = arith.addf %56, %58 : vector<40x128xf32>
    %cst_61 = arith.constant 0.000000e+00 : f32
    %60 = vector.broadcast %cst_61 : f32 to vector<40x128xf32>
    %61 = arith.maximumf %59, %60 : vector<40x128xf32>
    %62 = vector.extract_strided_slice %61 {offsets = [0, 0], sizes = [16, 128], strides = [1, 1]} : vector<40x128xf32> to vector<16x128xf32>
    %c0_62 = arith.constant 0 : index
    %c0_63 = arith.constant 0 : index
    %63 = vector.load %arg9[%c0_62, %c0_63] : memref<32x128xf32, #tpu.memory_space<vmem>>, vector<16x128xf32>
    tpu.vector_store %arg9[%c0_62, %c0_63], %62 {strides = array<i32>} : memref<32x128xf32, #tpu.memory_space<vmem>>, vector<16x128xf32>,
    %64 = vector.extract_strided_slice %61 {offsets = [24, 0], sizes = [16, 128], strides = [1, 1]} : vector<40x128xf32> to vector<16x128xf32>
    %c16_64 = arith.constant 16 : index
    %c0_65 = arith.constant 0 : index
    %65 = vector.load %arg9[%c16_64, %c0_65] : memref<32x128xf32, #tpu.memory_space<vmem>>, vector<16x128xf32>
    tpu.vector_store %arg9[%c16_64, %c0_65], %64 {strides = array<i32>} : memref<32x128xf32, #tpu.memory_space<vmem>>, vector<16x128xf32>,
    return
  }
  func.func @transform_0(%arg0: i32) -> (i32, i32) {
    %c0_i32 = arith.constant 0 : i32
    %c0_i32_0 = arith.constant 0 : i32
    return %arg0, %c0_i32 : i32, i32
  }
  func.func @transform_1(%arg0: i32) -> (i32, i32) {
    %c0_i32 = arith.constant 0 : i32
    %c0_i32_0 = arith.constant 0 : i32
    return %arg0, %c0_i32 : i32, i32
  }
  func.func @transform_2(%arg0: i32) -> (i32, i32) {
    %c0_i32 = arith.constant 0 : i32
    %c0_i32_0 = arith.constant 0 : i32
    %c0_i32_1 = arith.constant 0 : i32
    return %c0_i32, %c0_i32_0 : i32, i32
  }
  func.func @transform_3(%arg0: i32) -> (i32, i32) {
    %c0_i32 = arith.constant 0 : i32
    %c0_i32_0 = arith.constant 0 : i32
    %c0_i32_1 = arith.constant 0 : i32
    return %c0_i32, %c0_i32_0 : i32, i32
  }
  func.func @transform_4(%arg0: i32) -> (i32, i32, i32) {
    %c0_i32 = arith.constant 0 : i32
    %c0_i32_0 = arith.constant 0 : i32
    %c0_i32_1 = arith.constant 0 : i32
    %c0_i32_2 = arith.constant 0 : i32
    return %c0_i32, %c0_i32_0, %c0_i32_1 : i32, i32, i32
  }
  func.func @transform_5(%arg0: i32) -> (i32, i32) {
    %c0_i32 = arith.constant 0 : i32
    %c0_i32_0 = arith.constant 0 : i32
    %c0_i32_1 = arith.constant 0 : i32
    return %c0_i32, %c0_i32_0 : i32, i32
  }
  func.func @transform_6(%arg0: i32) -> (i32, i32, i32) {
    %c0_i32 = arith.constant 0 : i32
    %c0_i32_0 = arith.constant 0 : i32
    %c0_i32_1 = arith.constant 0 : i32
    %c0_i32_2 = arith.constant 0 : i32
    return %c0_i32, %c0_i32_0, %c0_i32_1 : i32, i32, i32
  }
  func.func @transform_7(%arg0: i32) -> (i32, i32) {
    %c0_i32 = arith.constant 0 : i32
    %c0_i32_0 = arith.constant 0 : i32
    %c0_i32_1 = arith.constant 0 : i32
    return %c0_i32, %c0_i32_0 : i32, i32
  }
  func.func @transform_8(%arg0: i32) -> (i32, i32) {
    %c0_i32 = arith.constant 0 : i32
    %c0_i32_0 = arith.constant 0 : i32
    return %arg0, %c0_i32 : i32, i32
  }
}

</mosaic_0001>

<llo_original>
// kernel: forward.1
$region0: #{forward.1}
  #allocation0 [shape = 'u32[]', space=smem, size = 0x4, offset = 0x4, fixed_abs, tag = 'smem constant byte address 0x4 - core index']
  #allocation1 [shape = 'u32[72,128]{1,0:T(1,128)}', space=vmem, size = 0x9000, scoped, tag = 'internal scratch']
  #allocation2 [shape = 'bf16[56,128]{1,0:T(8,128)(2,1)}', space=vmem, size = 0x3800, scoped, tag = 'scratch operand']
  #allocation3 [shape = 'bf16[56,64]{1,0:T(8,128)(2,1)}', space=vmem, size = 0x3800, scoped, tag = 'scratch operand']
  %s0 = inlined_call_operand.vmem [shape: bf16[16,32], index: 0, kind: input, shape index: {}]
  %s1 = inlined_call_operand.vmem [shape: bf16[32,64], index: 1, kind: input, shape index: {}]
  %s2 = inlined_call_operand.vmem [shape: bf16[32,128], index: 2, kind: input, shape index: {}]
  %s3 = inlined_call_operand.vmem [shape: bf16[56,16], index: 3, kind: input, shape index: {}]
  %s4 = inlined_call_operand.vmem [shape: bf16[3,128,64], index: 4, kind: input, shape index: {}]
  %s5 = inlined_call_operand.vmem [shape: f32[1,64], index: 5, kind: input, shape index: {}]
  %s6 = inlined_call_operand.vmem [shape: bf16[3,64,128], index: 6, kind: input, shape index: {}]
  %s7 = inlined_call_operand.vmem [shape: f32[1,128], index: 7, kind: input, shape index: {}]
  %s8 = inlined_call_operand.vmem [shape: f32[32,128], index: 8, kind: output, shape index: {}]
  %s9 = sld [smem:[#allocation0]]
  $region42: #{forward.1} parent=0
    _
  %s11 = ssub.s32 1, %s9
  %s12 = scalar_select 0, %s11, %s9
  // Predicated region
  $region2: #{forward.1} parent=0 // pred_check
    _
  $region3: #{forward.1} parent=0 // pred_check_branch
    %14 = sbr.rel (0) target = $region5
  $region4: #{forward.1} parent=0 // pred_region
    _
  $region5: #{forward.1} parent=0 // pred_fallthru
    _
  // Predicated region
  $region6: #{forward.1} parent=0 // pred_check
    _
  $region7: #{forward.1} parent=0 // pred_check_branch
    %16 = sbr.rel (0) target = $region9
  $region8: #{forward.1} parent=0 // pred_region
    _
  $region9: #{forward.1} parent=0 // pred_fallthru
    _
  // Predicated region
  $region10: #{forward.1} parent=0 // pred_check
    _
  $region11: #{forward.1} parent=0 // pred_check_branch
    %18 = sbr.rel (0) target = $region13
  $region12: #{forward.1} parent=0 // pred_region
    _
  $region13: #{forward.1} parent=0 // pred_fallthru
    _
  // Predicated region
  $region14: #{forward.1} parent=0 // pred_check
    _
  $region15: #{forward.1} parent=0 // pred_check_branch
    %20 = sbr.rel (0) target = $region17
  $region16: #{forward.1} parent=0 // pred_region
    _
  $region17: #{forward.1} parent=0 // pred_fallthru
    _
  // Predicated region
  $region18: #{forward.1} parent=0 // pred_check
    _
  $region19: #{forward.1} parent=0 // pred_check_branch
    %22 = sbr.rel (0) target = $region21
  $region20: #{forward.1} parent=0 // pred_region
    _
  $region21: #{forward.1} parent=0 // pred_fallthru
    _
  // Predicated region
  $region22: #{forward.1} parent=0 // pred_check
    _
  $region23: #{forward.1} parent=0 // pred_check_branch
    %24 = sbr.rel (0) target = $region25
  $region24: #{forward.1} parent=0 // pred_region
    _
  $region25: #{forward.1} parent=0 // pred_fallthru
    _
  // Predicated region
  $region26: #{forward.1} parent=0 // pred_check
    _
  $region27: #{forward.1} parent=0 // pred_check_branch
    %26 = sbr.rel (0) target = $region29
  $region28: #{forward.1} parent=0 // pred_region
    _
  $region29: #{forward.1} parent=0 // pred_fallthru
    _
  // Predicated region
  $region30: #{forward.1} parent=0 // pred_check
    _
  $region31: #{forward.1} parent=0 // pred_check_branch
    %28 = sbr.rel (0) target = $region33
  $region32: #{forward.1} parent=0 // pred_region
    _
  $region33: #{forward.1} parent=0 // pred_fallthru
    _
  %v30 = vld [vmem:[%s0] sm:$0xf]
  %v31 = vld [vmem:[%s0 + $0x4] sm:$0xf]
  %v32 = vld [vmem:[%s2] sm:$0xf]
  %v33 = vld [vmem:[%s2 + $0x4] sm:$0xf]
  %v34 = vld [vmem:[%s2 + $0x8] sm:$0xf]
  %v35 = vld [vmem:[%s2 + $0xc] sm:$0xf]
  %v38 = vunpack.c.l.b16 %v30
  %v39 = vunpack.c.l.b16 %v31
  %v40 = vpack.c.b16 %v39, %v38
  %v45 = vunpack.c.l.b16 %v32
  %v46 = vunpack.c.l.b16 %v33
  %v47 = vunpack.c.l.b16 %v34
  %v48 = vunpack.c.l.b16 %v35
  %v49 = vpack.c.b16 %v46, %v45
  %v50 = vpack.c.b16 %v48, %v47
  %vm53 = vcmask 261120
  %v55 = vsel %vm53, %v40, 0
  %57 = vmatpush.bf16.msra.mxu0 0
  %58 = vmatpush.bf16.msra.mxu0 0
  %59 = vmatpush.bf16.msra.mxu0 0
  %60 = vmatpush.bf16.msra.mxu0 0
  %61 = vmatpush.bf16.msra.mxu0 0
  %62 = vmatpush.bf16.msra.mxu0 0
  %63 = vmatpush.bf16.msra.mxu0 %v50
  %64 = vmatpush.bf16.msra.mxu0 %v49
  %65 = vmatmul.bf16.gmra.mxu0 %v55
  %v66 = vpop.f32.mrf.mxu0
  %v67 = vadd.f32 0.0, %v66
  %v68 = vpop.f32.mrf.mxu0
  %v69 = vadd.f32 0.0, %v68
  %70 = vdwg.mxu0
  %v71 = vld [vmem:[%s3] sm:$0xf]
  %v72 = vld [vmem:[%s3 + $0x4] sm:$0xf]
  %v73 = vld [vmem:[%s3 + $0x8] sm:$0xf]
  %v74 = vld [vmem:[%s3 + $0xc] sm:$0xf]
  %v75 = vld [vmem:[%s3 + $0x10] sm:$0xf]
  %v76 = vld [vmem:[%s3 + $0x14] sm:$0xf]
  %v77 = vld [vmem:[%s3 + $0x18] sm:$0xf]
  %v78 = vpack.c.bf16 %v69, %v67
  %v86 = vunpack.c.l.b16 %v71
  %v87 = vunpack.c.l.b16 %v72
  %v88 = vunpack.c.l.b16 %v73
  %v89 = vunpack.c.l.b16 %v74
  %v90 = vunpack.c.l.b16 %v75
  %v91 = vunpack.c.l.b16 %v76
  %v92 = vunpack.c.l.b16 %v77
  %v93 = vpack.c.b16 %v87, %v86
  %v94 = vpack.c.b16 %v89, %v88
  %v95 = vpack.c.b16 %v91, %v90
  %v96 = vpack.c.b16 %v92, %v92
  %vm97 = vcmask 130048
  %v99 = vsel %vm97, %v93, 0
  %v102 = vsel %vm97, %v94, 0
  %v105 = vsel %vm97, %v95, 0
  %v108 = vsel %vm97, %v96, 0
  %110 = vmatpush.bf16.msra.mxu0 0
  %111 = vmatpush.bf16.msra.mxu0 0
  %112 = vmatpush.bf16.msra.mxu0 0
  %113 = vmatpush.bf16.msra.mxu0 0
  %114 = vmatpush.bf16.msra.mxu0 0
  %115 = vmatpush.bf16.msra.mxu0 0
  %116 = vmatpush.bf16.msra.mxu0 0
  %117 = vmatpush.bf16.msra.mxu0 %v78
  %118 = vmatmul.bf16.gmra.mxu0 %v99
  %v119 = vpop.f32.mrf.mxu0
  %v120 = vadd.f32 0.0, %v119
  %v121 = vpop.f32.mrf.mxu0
  %v122 = vadd.f32 0.0, %v121
  %123 = vmatmul.bf16.gmra.mxu0 %v102
  %v124 = vpop.f32.mrf.mxu0
  %v125 = vadd.f32 0.0, %v124
  %v126 = vpop.f32.mrf.mxu0
  %v127 = vadd.f32 0.0, %v126
  %128 = vmatmul.bf16.gmra.mxu0 %v105
  %v129 = vpop.f32.mrf.mxu0
  %v130 = vadd.f32 0.0, %v129
  %v131 = vpop.f32.mrf.mxu0
  %v132 = vadd.f32 0.0, %v131
  %133 = vmatmul.bf16.gmra.mxu0 %v108
  %v134 = vpop.f32.mrf.mxu0
  %v135 = vadd.f32 0.0, %v134
  %v136 = vpop.f32.mrf.mxu0
  %137 = vdwg.mxu0
  %v138 = vpack.c.bf16 %v120, %v120
  %v139 = vpack.c.bf16 %v122, %v122
  %v140 = vpack.c.bf16 %v125, %v125
  %v141 = vpack.c.bf16 %v127, %v127
  %v142 = vpack.c.bf16 %v130, %v130
  %v143 = vpack.c.bf16 %v132, %v132
  %v144 = vpack.c.bf16 %v135, %v135
  %145 = vst [vmem:[#allocation2] sm:$0xf] %v138
  %146 = vst [vmem:[#allocation2 + $0x4] sm:$0xf] %v139
  %147 = vst [vmem:[#allocation2 + $0x8] sm:$0xf] %v140
  %148 = vst [vmem:[#allocation2 + $0xc] sm:$0xf] %v141
  %149 = vst [vmem:[#allocation2 + $0x10] sm:$0xf] %v142
  %150 = vst [vmem:[#allocation2 + $0x14] sm:$0xf] %v143
  %151 = vst [vmem:[#allocation2 + $0x18] sm:$0xf] %v144
  %v152 = vld [vmem:[%s1] sm:$0xf]
  %v153 = vld [vmem:[%s1 + $0x4] sm:$0xf]
  %vm154 = vcmask 519168
  %155 = vst.msk [vmem:[#allocation2 + $0x4] sm:$0xf] %vm154, %v152
  %156 = vst.msk [vmem:[#allocation2 + $0x8] sm:$0xf] %vm154, %v153
  %v157 = vld [vmem:[%s1 + $0x8] sm:$0xf]
  %v158 = vld [vmem:[%s1 + $0xc] sm:$0xf]
  %159 = vst.msk [vmem:[#allocation2 + $0x10] sm:$0xf] %vm154, %v157
  %160 = vst.msk [vmem:[#allocation2 + $0x14] sm:$0xf] %vm154, %v158
  %v161 = vld [vmem:[#allocation2] sm:$0x8]
  %v162 = vld [vmem:[#allocation2 + $0x4] sm:$0xf]
  %v163 = vld [vmem:[#allocation2 + $0x8] sm:$0xf]
  %v164 = vld [vmem:[#allocation2 + $0xc] sm:$0xf]
  %v165 = vld [vmem:[#allocation2 + $0x10] sm:$0xf]
  %v166 = vld [vmem:[#allocation2 + $0x14] sm:$0xf]
  %v167 = vld [vmem:[%s4] sm:$0xf]
  %v168 = vld [vmem:[%s4 + $0x4] sm:$0xf]
  %v169 = vld [vmem:[%s4 + $0x8] sm:$0xf]
  %v170 = vld [vmem:[%s4 + $0xc] sm:$0xf]
  %v171 = vld [vmem:[%s4 + $0x10] sm:$0xf]
  %v172 = vld [vmem:[%s4 + $0x14] sm:$0xf]
  %v173 = vld [vmem:[%s4 + $0x18] sm:$0xf]
  %v174 = vld [vmem:[%s4 + $0x1c] sm:$0xf]
  %v175 = vld [vmem:[%s4 + $0x20] sm:$0xf]
  %v176 = vld [vmem:[%s4 + $0x24] sm:$0xf]
  %v177 = vld [vmem:[%s4 + $0x28] sm:$0xf]
  %v178 = vld [vmem:[%s4 + $0x2c] sm:$0xf]
  %v179 = vld [vmem:[%s4 + $0x30] sm:$0xf]
  %v180 = vld [vmem:[%s4 + $0x34] sm:$0xf]
  %v181 = vld [vmem:[%s4 + $0x38] sm:$0xf]
  %v182 = vld [vmem:[%s4 + $0x3c] sm:$0xf]
  %s183 = scalar_lea.vmem %s4, 64
  %v184 = vld [vmem:[%s183] sm:$0xf]
  %v185 = vld [vmem:[%s183 + $0x4] sm:$0xf]
  %v186 = vld [vmem:[%s183 + $0x8] sm:$0xf]
  %v187 = vld [vmem:[%s183 + $0xc] sm:$0xf]
  %v188 = vld [vmem:[%s183 + $0x10] sm:$0xf]
  %v189 = vld [vmem:[%s183 + $0x14] sm:$0xf]
  %v190 = vld [vmem:[%s183 + $0x18] sm:$0xf]
  %v191 = vld [vmem:[%s183 + $0x1c] sm:$0xf]
  %v192 = vld [vmem:[%s183 + $0x20] sm:$0xf]
  %v193 = vld [vmem:[%s183 + $0x24] sm:$0xf]
  %v194 = vld [vmem:[%s183 + $0x28] sm:$0xf]
  %v195 = vld [vmem:[%s183 + $0x2c] sm:$0xf]
  %v196 = vld [vmem:[%s183 + $0x30] sm:$0xf]
  %v197 = vld [vmem:[%s183 + $0x34] sm:$0xf]
  %v198 = vld [vmem:[%s183 + $0x38] sm:$0xf]
  %v199 = vld [vmem:[%s183 + $0x3c] sm:$0xf]
  %v205 = vunpack.c.l.b16 %v162
  %v206 = vunpack.c.l.b16 %v163
  %v207 = vunpack.c.l.b16 %v164
  %v208 = vunpack.c.l.b16 %v165
  %v209 = vunpack.c.l.b16 %v166
  %v210 = vpack.c.b16 %v206, %v205
  %v211 = vpack.c.b16 %v208, %v207
  %v212 = vpack.c.b16 %v209, %v209
  %v232 = vunpack.c.l.b16 %v184
  %v233 = vunpack.c.l.b16 %v185
  %v234 = vunpack.c.l.b16 %v186
  %v235 = vunpack.c.l.b16 %v187
  %v236 = vunpack.c.l.b16 %v188
  %v237 = vunpack.c.l.b16 %v189
  %v238 = vunpack.c.l.b16 %v190
  %v239 = vunpack.c.l.b16 %v191
  %v240 = vunpack.c.l.b16 %v192
  %v241 = vunpack.c.l.b16 %v193
  %v242 = vunpack.c.l.b16 %v194
  %v243 = vunpack.c.l.b16 %v195
  %v244 = vunpack.c.l.b16 %v196
  %v245 = vunpack.c.l.b16 %v197
  %v246 = vunpack.c.l.b16 %v198
  %v247 = vunpack.c.l.b16 %v199
  %v248 = vpack.c.b16 %v233, %v232
  %v249 = vpack.c.b16 %v235, %v234
  %v250 = vpack.c.b16 %v237, %v236
  %v251 = vpack.c.b16 %v239, %v238
  %v252 = vpack.c.b16 %v241, %v240
  %v253 = vpack.c.b16 %v243, %v242
  %v254 = vpack.c.b16 %v245, %v244
  %v255 = vpack.c.b16 %v247, %v246
  %264 = vmatpush.bf16.msra.mxu0 %v255
  %265 = vmatpush.bf16.msra.mxu0 %v254
  %266 = vmatpush.bf16.msra.mxu0 %v253
  %267 = vmatpush.bf16.msra.mxu0 %v252
  %268 = vmatpush.bf16.msra.mxu0 %v251
  %269 = vmatpush.bf16.msra.mxu0 %v250
  %270 = vmatpush.bf16.msra.mxu0 %v249
  %271 = vmatpush.bf16.msra.mxu0 %v248
  %272 = vmatmul.bf16.gmra.mxu0 %v210
  %v273 = vpop.f32.mrf.mxu0
  %v274 = vadd.f32 0.0, %v273
  %v275 = vpop.f32.mrf.mxu0
  %v276 = vadd.f32 0.0, %v275
  %277 = vmatmul.bf16.gmra.mxu0 %v211
  %v278 = vpop.f32.mrf.mxu0
  %v279 = vadd.f32 0.0, %v278
  %v280 = vpop.f32.mrf.mxu0
  %v281 = vadd.f32 0.0, %v280
  %282 = vmatmul.bf16.gmra.mxu0 %v212
  %v283 = vpop.f32.mrf.mxu0
  %v284 = vadd.f32 0.0, %v283
  %v285 = vpop.f32.mrf.mxu0
  %286 = vdwg.mxu0
  %v288 = vunpack.c.l.b16 %v161
  %v289 = vpack.c.b16 %v205, %v288
  %v290 = vpack.c.b16 %v207, %v206
  %v291 = vpack.c.b16 %v209, %v208
  %vm292 = vsmask.f32 4352
  %v294 = vshrl.u32 %v289, 16
  %v296 = vrot.slane %v294, 3
  %v297 = vshll.u32 %v289, 16
  %v299 = vrot.slane %v297, 4
  %v300 = vor.u32 %v296, %v299
  %v302 = vshrl.u32 %v290, 16
  %v304 = vrot.slane %v302, 3
  %v305 = vshll.u32 %v290, 16
  %v307 = vrot.slane %v305, 4
  %v308 = vor.u32 %v304, %v307
  %v309 = vsel %vm292, %v300, %v308
  %v311 = vshrl.u32 %v291, 16
  %v313 = vrot.slane %v311, 3
  %v314 = vshll.u32 %v291, 16
  %v316 = vrot.slane %v314, 4
  %v317 = vor.u32 %v313, %v316
  %v318 = vsel %vm292, %v308, %v317
  %v338 = vunpack.c.l.b16 %v167
  %v339 = vunpack.c.l.b16 %v168
  %v340 = vunpack.c.l.b16 %v169
  %v341 = vunpack.c.l.b16 %v170
  %v342 = vunpack.c.l.b16 %v171
  %v343 = vunpack.c.l.b16 %v172
  %v344 = vunpack.c.l.b16 %v173
  %v345 = vunpack.c.l.b16 %v174
  %v346 = vunpack.c.l.b16 %v175
  %v347 = vunpack.c.l.b16 %v176
  %v348 = vunpack.c.l.b16 %v177
  %v349 = vunpack.c.l.b16 %v178
  %v350 = vunpack.c.l.b16 %v179
  %v351 = vunpack.c.l.b16 %v180
  %v352 = vunpack.c.l.b16 %v181
  %v353 = vunpack.c.l.b16 %v182
  %v354 = vpack.c.b16 %v339, %v338
  %v355 = vpack.c.b16 %v341, %v340
  %v356 = vpack.c.b16 %v343, %v342
  %v357 = vpack.c.b16 %v345, %v344
  %v358 = vpack.c.b16 %v347, %v346
  %v359 = vpack.c.b16 %v349, %v348
  %v360 = vpack.c.b16 %v351, %v350
  %v361 = vpack.c.b16 %v353, %v352
  %370 = vmatpush.bf16.msra.mxu0 %v361
  %371 = vmatpush.bf16.msra.mxu0 %v360
  %372 = vmatpush.bf16.msra.mxu0 %v359
  %373 = vmatpush.bf16.msra.mxu0 %v358
  %374 = vmatpush.bf16.msra.mxu0 %v357
  %375 = vmatpush.bf16.msra.mxu0 %v356
  %376 = vmatpush.bf16.msra.mxu0 %v355
  %377 = vmatpush.bf16.msra.mxu0 %v354
  %378 = vmatmul.bf16.gmra.mxu0 %v309
  %v379 = vpop.f32.mrf.mxu0
  %v380 = vadd.f32 %v274, %v379
  %v381 = vpop.f32.mrf.mxu0
  %v382 = vadd.f32 %v276, %v381
  %383 = vmatmul.bf16.gmra.mxu0 %v318
  %v384 = vpop.f32.mrf.mxu0
  %v385 = vadd.f32 %v279, %v384
  %v386 = vpop.f32.mrf.mxu0
  %v387 = vadd.f32 %v281, %v386
  %388 = vmatmul.bf16.gmra.mxu0 %v317
  %v389 = vpop.f32.mrf.mxu0
  %v390 = vadd.f32 %v284, %v389
  %v391 = vpop.f32.mrf.mxu0
  %392 = vdwg.mxu0
  %v393 = vld [vmem:[#allocation2 + $0x4] sm:$0xf]
  %v394 = vld [vmem:[#allocation2 + $0x8] sm:$0xf]
  %v395 = vld [vmem:[#allocation2 + $0xc] sm:$0xf]
  %v396 = vld [vmem:[#allocation2 + $0x10] sm:$0xf]
  %v397 = vld [vmem:[#allocation2 + $0x14] sm:$0xf]
  %v398 = vld [vmem:[#allocation2 + $0x18] sm:$0x1]
  %s399 = scalar_lea.vmem %s4, 128
  %v400 = vld [vmem:[%s399] sm:$0xf]
  %v401 = vld [vmem:[%s399 + $0x4] sm:$0xf]
  %v402 = vld [vmem:[%s399 + $0x8] sm:$0xf]
  %v403 = vld [vmem:[%s399 + $0xc] sm:$0xf]
  %v404 = vld [vmem:[%s399 + $0x10] sm:$0xf]
  %v405 = vld [vmem:[%s399 + $0x14] sm:$0xf]
  %v406 = vld [vmem:[%s399 + $0x18] sm:$0xf]
  %v407 = vld [vmem:[%s399 + $0x1c] sm:$0xf]
  %v408 = vld [vmem:[%s399 + $0x20] sm:$0xf]
  %v409 = vld [vmem:[%s399 + $0x24] sm:$0xf]
  %v410 = vld [vmem:[%s399 + $0x28] sm:$0xf]
  %v411 = vld [vmem:[%s399 + $0x2c] sm:$0xf]
  %v412 = vld [vmem:[%s399 + $0x30] sm:$0xf]
  %v413 = vld [vmem:[%s399 + $0x34] sm:$0xf]
  %v414 = vld [vmem:[%s399 + $0x38] sm:$0xf]
  %v415 = vld [vmem:[%s399 + $0x3c] sm:$0xf]
  %v422 = vunpack.c.l.b16 %v393
  %v423 = vunpack.c.l.b16 %v394
  %v424 = vunpack.c.l.b16 %v395
  %v425 = vunpack.c.l.b16 %v396
  %v426 = vunpack.c.l.b16 %v397
  %v427 = vunpack.c.l.b16 %v398
  %v428 = vpack.c.b16 %v423, %v422
  %v429 = vpack.c.b16 %v425, %v424
  %v430 = vpack.c.b16 %v427, %v426
  %vm431 = vsmask.f32 7424
  %v433 = vshrl.u32 %v428, 16
  %v435 = vshll.u32 %v428, 16
  %v437 = vrot.slane %v435, 1
  %v438 = vor.u32 %v433, %v437
  %v440 = vshll.u32 %v429, 16
  %v442 = vrot.slane %v440, 1
  %v443 = vsel %vm431, %v438, %v442
  %v444 = vshrl.u32 %v429, 16
  %v446 = vor.u32 %v444, %v442
  %v448 = vshll.u32 %v430, 16
  %v450 = vrot.slane %v448, 1
  %v451 = vsel %vm431, %v446, %v450
  %v452 = vshrl.u32 %v430, 16
  %v454 = vor.u32 %v452, %v450
  %v474 = vunpack.c.l.b16 %v400
  %v475 = vunpack.c.l.b16 %v401
  %v476 = vunpack.c.l.b16 %v402
  %v477 = vunpack.c.l.b16 %v403
  %v478 = vunpack.c.l.b16 %v404
  %v479 = vunpack.c.l.b16 %v405
  %v480 = vunpack.c.l.b16 %v406
  %v481 = vunpack.c.l.b16 %v407
  %v482 = vunpack.c.l.b16 %v408
  %v483 = vunpack.c.l.b16 %v409
  %v484 = vunpack.c.l.b16 %v410
  %v485 = vunpack.c.l.b16 %v411
  %v486 = vunpack.c.l.b16 %v412
  %v487 = vunpack.c.l.b16 %v413
  %v488 = vunpack.c.l.b16 %v414
  %v489 = vunpack.c.l.b16 %v415
  %v490 = vpack.c.b16 %v475, %v474
  %v491 = vpack.c.b16 %v477, %v476
  %v492 = vpack.c.b16 %v479, %v478
  %v493 = vpack.c.b16 %v481, %v480
  %v494 = vpack.c.b16 %v483, %v482
  %v495 = vpack.c.b16 %v485, %v484
  %v496 = vpack.c.b16 %v487, %v486
  %v497 = vpack.c.b16 %v489, %v488
  %506 = vmatpush.bf16.msra.mxu0 %v497
  %507 = vmatpush.bf16.msra.mxu0 %v496
  %508 = vmatpush.bf16.msra.mxu0 %v495
  %509 = vmatpush.bf16.msra.mxu0 %v494
  %510 = vmatpush.bf16.msra.mxu0 %v493
  %511 = vmatpush.bf16.msra.mxu0 %v492
  %512 = vmatpush.bf16.msra.mxu0 %v491
  %513 = vmatpush.bf16.msra.mxu0 %v490
  %514 = vmatmul.bf16.gmra.mxu0 %v443
  %v515 = vpop.f32.mrf.mxu0
  %v516 = vadd.f32 0.0, %v515
  %v517 = vpop.f32.mrf.mxu0
  %v518 = vadd.f32 0.0, %v517
  %519 = vmatmul.bf16.gmra.mxu0 %v451
  %v520 = vpop.f32.mrf.mxu0
  %v521 = vadd.f32 0.0, %v520
  %v522 = vpop.f32.mrf.mxu0
  %v523 = vadd.f32 0.0, %v522
  %524 = vmatmul.bf16.gmra.mxu0 %v454
  %v525 = vpop.f32.mrf.mxu0
  %v526 = vadd.f32 0.0, %v525
  %v527 = vpop.f32.mrf.mxu0
  %528 = vdwg.mxu0
  %v529 = vadd.f32 %v380, %v516
  %v530 = vadd.f32 %v382, %v518
  %v531 = vadd.f32 %v385, %v521
  %v532 = vadd.f32 %v387, %v523
  %v533 = vadd.f32 %v390, %v526
  %v534 = vld [vmem:[%s5] sm:$0x1]
  %v536 = vperm.slane %v534, 0
  %v538 = vadd.f32 %v529, %v536
  %v539 = vadd.f32 %v530, %v536
  %v540 = vadd.f32 %v531, %v536
  %v541 = vadd.f32 %v532, %v536
  %v542 = vadd.f32 %v533, %v536
  %v543 = vmax.f32 %v538, 0.0
  %v544 = vmax.f32 %v539, 0.0
  %v545 = vmax.f32 %v540, 0.0
  %v546 = vmax.f32 %v541, 0.0
  %v547 = vmax.f32 %v542, 0.0
  %v548 = vpack.c.bf16 %v543, %v543
  %v549 = vpack.c.bf16 %v544, %v544
  %v550 = vpack.c.bf16 %v545, %v545
  %v551 = vpack.c.bf16 %v546, %v546
  %v552 = vpack.c.bf16 %v547, %v547
  %553 = vst.msk [vmem:[#allocation3 + $0x4] sm:$0xf] %vm154, %v548
  %554 = vst.msk [vmem:[#allocation3 + $0x8] sm:$0xf] %vm154, %v549
  %555 = vst.msk [vmem:[#allocation3 + $0xc] sm:$0xf] %vm154, %v550
  %556 = vst.msk [vmem:[#allocation3 + $0x10] sm:$0xf] %vm154, %v551
  %557 = vst.msk [vmem:[#allocation3 + $0x14] sm:$0xf] %vm154, %v552
  %558 = vst.msk [vmem:[#allocation3] sm:$0xf] %vm154, 0
  %559 = vst.msk [vmem:[#allocation3 + $0xc] sm:$0xf] %vm154, 0
  %560 = vst.msk [vmem:[#allocation3 + $0x18] sm:$0xf] %vm154, 0
  %v561 = vld [vmem:[#allocation3] sm:$0x8]
  %v562 = vld [vmem:[#allocation3 + $0x4] sm:$0xf]
  %v563 = vld [vmem:[#allocation3 + $0x8] sm:$0xf]
  %v564 = vld [vmem:[#allocation3 + $0xc] sm:$0xf]
  %v565 = vld [vmem:[#allocation3 + $0x10] sm:$0xf]
  %v566 = vld [vmem:[#allocation3 + $0x14] sm:$0xf]
  %v567 = vld [vmem:[%s6] sm:$0xf]
  %v568 = vld [vmem:[%s6 + $0x4] sm:$0xf]
  %v569 = vld [vmem:[%s6 + $0x8] sm:$0xf]
  %v570 = vld [vmem:[%s6 + $0xc] sm:$0xf]
  %v571 = vld [vmem:[%s6 + $0x10] sm:$0xf]
  %v572 = vld [vmem:[%s6 + $0x14] sm:$0xf]
  %v573 = vld [vmem:[%s6 + $0x18] sm:$0xf]
  %v574 = vld [vmem:[%s6 + $0x1c] sm:$0xf]
  %s575 = scalar_lea.vmem %s6, 32
  %v576 = vld [vmem:[%s575] sm:$0xf]
  %v577 = vld [vmem:[%s575 + $0x4] sm:$0xf]
  %v578 = vld [vmem:[%s575 + $0x8] sm:$0xf]
  %v579 = vld [vmem:[%s575 + $0xc] sm:$0xf]
  %v580 = vld [vmem:[%s575 + $0x10] sm:$0xf]
  %v581 = vld [vmem:[%s575 + $0x14] sm:$0xf]
  %v582 = vld [vmem:[%s575 + $0x18] sm:$0xf]
  %v583 = vld [vmem:[%s575 + $0x1c] sm:$0xf]
  %v589 = vunpack.c.l.b16 %v562
  %v590 = vunpack.c.l.b16 %v563
  %v591 = vunpack.c.l.b16 %v564
  %v592 = vunpack.c.l.b16 %v565
  %v593 = vunpack.c.l.b16 %v566
  %v594 = vpack.c.b16 %v590, %v589
  %v595 = vpack.c.b16 %v592, %v591
  %v596 = vpack.c.b16 %v593, %v593
  %v605 = vunpack.c.l.b16 %v576
  %v606 = vunpack.c.l.b16 %v577
  %v607 = vunpack.c.l.b16 %v578
  %v608 = vunpack.c.l.b16 %v579
  %v609 = vunpack.c.l.b16 %v580
  %v610 = vunpack.c.l.b16 %v581
  %v611 = vunpack.c.l.b16 %v582
  %v612 = vunpack.c.l.b16 %v583
  %v613 = vpack.c.b16 %v606, %v605
  %v614 = vpack.c.b16 %v608, %v607
  %v615 = vpack.c.b16 %v610, %v609
  %v616 = vpack.c.b16 %v612, %v611
  %vm621 = vcmask 523264
  %v623 = vsel %vm621, %v594, 0
  %v626 = vsel %vm621, %v595, 0
  %v629 = vsel %vm621, %v596, 0
  %631 = vmatpush.bf16.msra.mxu0 0
  %632 = vmatpush.bf16.msra.mxu0 0
  %633 = vmatpush.bf16.msra.mxu0 0
  %634 = vmatpush.bf16.msra.mxu0 0
  %635 = vmatpush.bf16.msra.mxu0 %v616
  %636 = vmatpush.bf16.msra.mxu0 %v615
  %637 = vmatpush.bf16.msra.mxu0 %v614
  %638 = vmatpush.bf16.msra.mxu0 %v613
  %639 = vmatmul.bf16.gmra.mxu0 %v623
  %v640 = vpop.f32.mrf.mxu0
  %v641 = vadd.f32 0.0, %v640
  %v642 = vpop.f32.mrf.mxu0
  %v643 = vadd.f32 0.0, %v642
  %644 = vmatmul.bf16.gmra.mxu0 %v626
  %v645 = vpop.f32.mrf.mxu0
  %v646 = vpop.f32.mrf.mxu0
  %v647 = vadd.f32 0.0, %v646
  %648 = vmatmul.bf16.gmra.mxu0 %v629
  %v649 = vpop.f32.mrf.mxu0
  %v650 = vadd.f32 0.0, %v649
  %v651 = vpop.f32.mrf.mxu0
  %652 = vdwg.mxu0
  %v654 = vunpack.c.l.b16 %v561
  %v655 = vpack.c.b16 %v589, %v654
  %v656 = vpack.c.b16 %v591, %v590
  %v657 = vpack.c.b16 %v593, %v592
  %v659 = vshrl.u32 %v655, 16
  %v661 = vrot.slane %v659, 3
  %v662 = vshll.u32 %v655, 16
  %v664 = vrot.slane %v662, 4
  %v665 = vor.u32 %v661, %v664
  %v667 = vshrl.u32 %v656, 16
  %v669 = vrot.slane %v667, 3
  %v670 = vshll.u32 %v656, 16
  %v672 = vrot.slane %v670, 4
  %v673 = vor.u32 %v669, %v672
  %v674 = vsel %vm292, %v665, %v673
  %v676 = vshrl.u32 %v657, 16
  %v678 = vrot.slane %v676, 3
  %v679 = vshll.u32 %v657, 16
  %v681 = vrot.slane %v679, 4
  %v682 = vor.u32 %v678, %v681
  %v683 = vsel %vm292, %v673, %v682
  %v692 = vunpack.c.l.b16 %v567
  %v693 = vunpack.c.l.b16 %v568
  %v694 = vunpack.c.l.b16 %v569
  %v695 = vunpack.c.l.b16 %v570
  %v696 = vunpack.c.l.b16 %v571
  %v697 = vunpack.c.l.b16 %v572
  %v698 = vunpack.c.l.b16 %v573
  %v699 = vunpack.c.l.b16 %v574
  %v700 = vpack.c.b16 %v693, %v692
  %v701 = vpack.c.b16 %v695, %v694
  %v702 = vpack.c.b16 %v697, %v696
  %v703 = vpack.c.b16 %v699, %v698
  %v709 = vsel %vm621, %v674, 0
  %v712 = vsel %vm621, %v683, 0
  %v715 = vsel %vm621, %v682, 0
  %717 = vmatpush.bf16.msra.mxu0 0
  %718 = vmatpush.bf16.msra.mxu0 0
  %719 = vmatpush.bf16.msra.mxu0 0
  %720 = vmatpush.bf16.msra.mxu0 0
  %721 = vmatpush.bf16.msra.mxu0 %v703
  %722 = vmatpush.bf16.msra.mxu0 %v702
  %723 = vmatpush.bf16.msra.mxu0 %v701
  %724 = vmatpush.bf16.msra.mxu0 %v700
  %725 = vmatmul.bf16.gmra.mxu0 %v709
  %v726 = vpop.f32.mrf.mxu0
  %v727 = vadd.f32 %v641, %v726
  %v728 = vpop.f32.mrf.mxu0
  %v729 = vadd.f32 %v643, %v728
  %730 = vmatmul.bf16.gmra.mxu0 %v712
  %v731 = vpop.f32.mrf.mxu0
  %v732 = vpop.f32.mrf.mxu0
  %v733 = vadd.f32 %v647, %v732
  %734 = vmatmul.bf16.gmra.mxu0 %v715
  %v735 = vpop.f32.mrf.mxu0
  %v736 = vadd.f32 %v650, %v735
  %v737 = vpop.f32.mrf.mxu0
  %738 = vdwg.mxu0
  %v739 = vld [vmem:[#allocation3 + $0x4] sm:$0xf]
  %v740 = vld [vmem:[#allocation3 + $0x8] sm:$0xf]
  %v741 = vld [vmem:[#allocation3 + $0xc] sm:$0xf]
  %v742 = vld [vmem:[#allocation3 + $0x10] sm:$0xf]
  %v743 = vld [vmem:[#allocation3 + $0x14] sm:$0xf]
  %v744 = vld [vmem:[#allocation3 + $0x18] sm:$0x1]
  %s745 = scalar_lea.vmem %s6, 64
  %v746 = vld [vmem:[%s745] sm:$0xf]
  %v747 = vld [vmem:[%s745 + $0x4] sm:$0xf]
  %v748 = vld [vmem:[%s745 + $0x8] sm:$0xf]
  %v749 = vld [vmem:[%s745 + $0xc] sm:$0xf]
  %v750 = vld [vmem:[%s745 + $0x10] sm:$0xf]
  %v751 = vld [vmem:[%s745 + $0x14] sm:$0xf]
  %v752 = vld [vmem:[%s745 + $0x18] sm:$0xf]
  %v753 = vld [vmem:[%s745 + $0x1c] sm:$0xf]
  %v760 = vunpack.c.l.b16 %v739
  %v761 = vunpack.c.l.b16 %v740
  %v762 = vunpack.c.l.b16 %v741
  %v763 = vunpack.c.l.b16 %v742
  %v764 = vunpack.c.l.b16 %v743
  %v765 = vunpack.c.l.b16 %v744
  %v766 = vpack.c.b16 %v761, %v760
  %v767 = vpack.c.b16 %v763, %v762
  %v768 = vpack.c.b16 %v765, %v764
  %v770 = vshrl.u32 %v766, 16
  %v772 = vshll.u32 %v766, 16
  %v774 = vrot.slane %v772, 1
  %v775 = vor.u32 %v770, %v774
  %v777 = vshll.u32 %v767, 16
  %v779 = vrot.slane %v777, 1
  %v780 = vsel %vm431, %v775, %v779
  %v781 = vshrl.u32 %v767, 16
  %v783 = vor.u32 %v781, %v779
  %v785 = vshll.u32 %v768, 16
  %v787 = vrot.slane %v785, 1
  %v788 = vsel %vm431, %v783, %v787
  %v789 = vshrl.u32 %v768, 16
  %v791 = vor.u32 %v789, %v787
  %v800 = vunpack.c.l.b16 %v746
  %v801 = vunpack.c.l.b16 %v747
  %v802 = vunpack.c.l.b16 %v748
  %v803 = vunpack.c.l.b16 %v749
  %v804 = vunpack.c.l.b16 %v750
  %v805 = vunpack.c.l.b16 %v751
  %v806 = vunpack.c.l.b16 %v752
  %v807 = vunpack.c.l.b16 %v753
  %v808 = vpack.c.b16 %v801, %v800
  %v809 = vpack.c.b16 %v803, %v802
  %v810 = vpack.c.b16 %v805, %v804
  %v811 = vpack.c.b16 %v807, %v806
  %v817 = vsel %vm621, %v780, 0
  %v820 = vsel %vm621, %v788, 0
  %v823 = vsel %vm621, %v791, 0
  %825 = vmatpush.bf16.msra.mxu0 0
  %826 = vmatpush.bf16.msra.mxu0 0
  %827 = vmatpush.bf16.msra.mxu0 0
  %828 = vmatpush.bf16.msra.mxu0 0
  %829 = vmatpush.bf16.msra.mxu0 %v811
  %830 = vmatpush.bf16.msra.mxu0 %v810
  %831 = vmatpush.bf16.msra.mxu0 %v809
  %832 = vmatpush.bf16.msra.mxu0 %v808
  %833 = vmatmul.bf16.gmra.mxu0 %v817
  %v834 = vpop.f32.mrf.mxu0
  %v835 = vadd.f32 0.0, %v834
  %v836 = vpop.f32.mrf.mxu0
  %v837 = vadd.f32 0.0, %v836
  %838 = vmatmul.bf16.gmra.mxu0 %v820
  %v839 = vpop.f32.mrf.mxu0
  %v840 = vpop.f32.mrf.mxu0
  %v841 = vadd.f32 0.0, %v840
  %842 = vmatmul.bf16.gmra.mxu0 %v823
  %v843 = vpop.f32.mrf.mxu0
  %v844 = vadd.f32 0.0, %v843
  %v845 = vpop.f32.mrf.mxu0
  %846 = vdwg.mxu0
  %v847 = vadd.f32 %v727, %v835
  %v848 = vadd.f32 %v729, %v837
  %v849 = vadd.f32 %v733, %v841
  %v850 = vadd.f32 %v736, %v844
  %v851 = vld [vmem:[%s7] sm:$0x1]
  %v853 = vperm.slane %v851, 0
  %v855 = vadd.f32 %v847, %v853
  %v856 = vadd.f32 %v848, %v853
  %v857 = vadd.f32 %v849, %v853
  %v858 = vadd.f32 %v850, %v853
  %v859 = vmax.f32 %v855, 0.0
  %v860 = vmax.f32 %v856, 0.0
  %v861 = vmax.f32 %v857, 0.0
  %v862 = vmax.f32 %v858, 0.0
  %863 = vst [vmem:[%s8] sm:$0xff] %v859
  %864 = vst [vmem:[%s8 + $0x8] sm:$0xff] %v860
  %865 = vst [vmem:[%s8 + $0x10] sm:$0xff] %v861
  %866 = vst [vmem:[%s8 + $0x18] sm:$0xff] %v862
  // Predicated region
  $region34: #{forward.1} parent=0 // pred_check
    _
  $region35: #{forward.1} parent=0 // pred_check_branch
    %868 = sbr.rel (0) target = $region37
  $region36: #{forward.1} parent=0 // pred_region
    _
  $region37: #{forward.1} parent=0 // pred_fallthru
    _
  // Predicated region
  $region38: #{forward.1} parent=0 // pred_check
    _
  $region39: #{forward.1} parent=0 // pred_check_branch
    %870 = sbr.rel (0) target = $region41
  $region40: #{forward.1} parent=0 // pred_region
    _
  $region41: #{forward.1} parent=0 // pred_fallthru
    _

</llo_original>
